<compile_context>
chip_gen: v5e
topology: v5e:2x2
jax: 0.10.0
libtpu: 0.0.40
codegen_flags: <defaults>
</compile_context>

<pallas_src>
import functools

import jax
import jax.numpy as jnp
import numpy as np
from jax.experimental import pallas as pl
from jax.experimental.pallas import tpu as pltpu


def _shortcut_conv_kernel(x_ref, w_ref, b_ref, o_ref, stk_ref, *, H, W):
    """out = x + conv3x3(x) + b for one batch element, flat NCHW layout.

    x_ref  : (1, C, H*W)        input tile (lane-dense, channels on sublanes)
    w_ref  : (Cout, 9*Cin_pad)  conv weights packed for one fused contraction
    b_ref  : (Cout, 1)          conv bias
    o_ref  : (1, Cout, H*W)     output tile
    stk_ref: (9*Cin_pad, H*W)   VMEM scratch holding the stacked shifted taps
    """
    C = x_ref.shape[1]
    P = H * W
    KC = stk_ref.shape[0]
    cin_pad = KC // 9

    x2d = x_ref[0].astype(jnp.float32)                     # (Cin, P)

    # Pad channels to a multiple of 8 once, so every stacked tap lands on an
    # 8-sublane tile boundary in the scratch (tile-aligned, unmasked stores).
    if cin_pad > C:
        xp = jnp.concatenate(
            [x2d, jnp.zeros((cin_pad - C, P), jnp.float32)], axis=0)
    else:
        xp = x2d

    # (1, P) border masks (broadcast at the where): row masks compare the flat
    # index p = h*W + w directly; column masks need p % W (bitwise AND when W is a
    # power of two, otherwise a tiny (1, P) constant — never a (C, P) constant).
    p_idx = jax.lax.broadcasted_iota(jnp.int32, (1, P), 1)
    if (W & (W - 1)) == 0:
        w_idx = p_idx & (W - 1)
    else:
        w_idx = jnp.asarray(np.arange(P, dtype=np.int32).reshape(1, P) % W)
    h_ok = {-1: p_idx >= W, 0: None, 1: p_idx < (H - 1) * W}
    w_ok = {-1: w_idx >= 1, 0: None, 1: w_idx < (W - 1)}

    # Build the stacked RHS: tap (kh, kw) = flat roll by d = (kh-1)*W + (kw-1)
    # (XLU slot) + zero border mask, written to rows [t*cin_pad, (t+1)*cin_pad).
    for kh in range(3):
        for kw in range(3):
            dh, dw = kh - 1, kw - 1
            d = dh * W + dw
            shifted = xp if d == 0 else pltpu.roll(xp, (-d) % P, axis=1)
            mask = None
            for m in (h_ok[dh], w_ok[dw]):
                if m is not None:
                    mask = m if mask is None else (mask & m)
            if mask is not None:
                shifted = jnp.where(mask, shifted, 0.0)    # (1,P) mask broadcasts
            t = kh * 3 + kw
            stk_ref[t * cin_pad:(t + 1) * cin_pad, :] = shifted

    # One fused contraction over K = 9*Cin_pad (instead of 9 K=Cin dots):
    # better MXU fill, accumulation stays in the matrix unit (MRB on v7x).
    conv = jnp.dot(w_ref[...], stk_ref[...],
                   preferred_element_type=jnp.float32)     # (Cout, P)

    # Residual comes from the same VMEM tile as the conv input (single HBM read),
    # output last dim is H*W (multiple of 128) -> lane-dense unmasked stores.
    o_ref[0] = (x2d + conv + b_ref[...].astype(jnp.float32)).astype(o_ref.dtype)


def shortcut_block(x_nchw, w, b):
    """ShortcutBlock forward: out = x + Conv2d3x3(x; w, b).

    x_nchw: (B, C, H, W) float32     (PyTorch NCHW layout, used as-is — no transpose)
    w     : (3, 3, Cin, Cout) float32 (HWIO)
    b     : (Cout,) float32
    """
    B, C, H, W = x_nchw.shape
    P = H * W
    cin_pad = -(-C // 8) * 8                  # Cin rounded up to a sublane tile
    KC = 9 * cin_pad

    # Free layout plumbing: contiguous reshape of x + a tiny one-time weight repack
    # (3,3,Cin,Cout) -> (Cout, 9*Cin_pad) so the 9 taps contract in ONE MXU dot.
    x_flat = x_nchw.reshape(B, C, P)
    w_big = jnp.transpose(w, (3, 0, 1, 2))                     # (Cout, 3, 3, Cin)
    w_big = jnp.pad(w_big, ((0, 0), (0, 0), (0, 0), (0, cin_pad - C)))
    w_big = w_big.reshape(C, KC)                               # (Cout, 9*Cin_pad)
    b2 = b.reshape(C, 1)

    kernel = functools.partial(_shortcut_conv_kernel, H=H, W=W)

    cost = pl.CostEstimate(
        flops=2 * B * 9 * C * C * P,
        transcendentals=0,
        bytes_accessed=(2 * B * C * P + w_big.size + b2.size) * 4,
    )

    def call(single_buffer_invariants):
        inv_kwargs = {}
        if single_buffer_invariants and hasattr(pl, "Buffered"):
            # Weights / bias are grid-invariant: default double-buffering is pure
            # VMEM waste, so request a single buffer.
            inv_kwargs["pipeline_mode"] = pl.Buffered(buffer_count=1)
        grid_spec = pltpu.PrefetchScalarGridSpec(
            num_scalar_prefetch=0,
            grid=(B,),
            in_specs=[
                pl.BlockSpec((1, C, P), lambda bi: (bi, 0, 0)),
                pl.BlockSpec((C, KC), lambda bi: (0, 0), **inv_kwargs),
                pl.BlockSpec((C, 1), lambda bi: (0, 0), **inv_kwargs),
            ],
            out_specs=pl.BlockSpec((1, C, P), lambda bi: (bi, 0, 0)),
            scratch_shapes=[pltpu.VMEM((KC, P), jnp.float32)],
        )
        return pl.pallas_call(
            kernel,
            out_shape=jax.ShapeDtypeStruct((B, C, P), x_nchw.dtype),
            grid_spec=grid_spec,
            compiler_params=pltpu.CompilerParams(
                dimension_semantics=("parallel",),
            ),
            cost_estimate=cost,
        )(x_flat, w_big, b2)

    try:
        out_flat = call(True)
    except Exception:
        # pl.Buffered(buffer_count=1) not supported by this JAX build -> fall back
        # to default (double-buffered) specs; semantics are identical.
        out_flat = call(False)

    return out_flat.reshape(B, C, H, W)


def _reference(x_nchw, w, b):
    # Pure-JAX reference: x + conv3x3(x) + b in NCHW.
    conv = jax.lax.conv_general_dilated(
        x_nchw, w,
        window_strides=(1, 1),
        padding=((1, 1), (1, 1)),
        dimension_numbers=("NCHW", "HWIO", "NCHW"),
        precision=jax.lax.Precision.HIGHEST,
    )
    return x_nchw + conv + b.reshape(1, -1, 1, 1)


if __name__ == "__main__":
    B, C, H, W = 2, 4, 16, 16

    key = jax.random.PRNGKey(0)
    kx, kw, kb = jax.random.split(key, 3)
    x = jax.random.normal(kx, (B, C, H, W), dtype=jnp.float32)
    w = jax.random.normal(kw, (3, 3, C, C), dtype=jnp.float32) * 0.1
    b = jax.random.normal(kb, (C,), dtype=jnp.float32) * 0.1

    out = jax.block_until_ready(shortcut_block(x, w, b))

    ref = _reference(x, w, b)
    assert out.shape == (B, C, H, W)
    assert jnp.allclose(out, ref, atol=1e-3, rtol=1e-3), float(
        jnp.max(jnp.abs(out - ref)))

    print("KERNEL_OK")
</pallas_src>

<mosaic_0001>
module attributes {stable_mosaic.version = 11 : i64} {
  func.func @_shortcut_conv_kernel(%arg0: i32, %arg1: memref<1x4x256xf32, #tpu.memory_space<vmem>>, %arg2: memref<4x72xf32, #tpu.memory_space<vmem>>, %arg3: memref<4x1xf32, #tpu.memory_space<vmem>>, %arg4: memref<1x4x256xf32, #tpu.memory_space<vmem>>, %arg5: memref<72x256xf32, #tpu.memory_space<vmem>>) attributes {dimension_semantics = [#tpu.dimension_semantics<parallel>], iteration_bounds = array<i64: 2>, scalar_prefetch = 0 : i64, scratch_operands = 1 : i64, tpu.core_type = #tpu.core_type<tc>, window_params = [{transform_indices = @transform_0, window_bounds = array<i64: 1, 4, 256>}, {pipeline_mode = #tpu.pipeline_mode<synchronous>, transform_indices = @transform_1, window_bounds = array<i64: 4, 72>}, {pipeline_mode = #tpu.pipeline_mode<synchronous>, transform_indices = @transform_2, window_bounds = array<i64: 4, 1>}, {transform_indices = @transform_3, window_bounds = array<i64: 1, 4, 256>}]} {
    %c0 = arith.constant 0 : index
    %c0_0 = arith.constant 0 : index
    %c0_1 = arith.constant 0 : index
    %0 = vector.load %arg1[%c0, %c0_0, %c0_1] : memref<1x4x256xf32, #tpu.memory_space<vmem>>, vector<1x4x256xf32>
    %1 = vector.shape_cast %0 : vector<1x4x256xf32> to vector<4x256xf32>
    %cst = arith.constant 0.000000e+00 : f32
    %2 = vector.broadcast %cst : f32 to vector<4x256xf32>
    %3 = tpu.concatenate %1, %2 in 0 : vector<4x256xf32>, vector<4x256xf32> -> vector<8x256xf32>
    %4 = tpu.iota {dimensions = array<i32: 1>} : vector<1x256xi32>
    %c15_i32 = arith.constant 15 : i32
    %5 = vector.broadcast %c15_i32 : i32 to vector<1x256xi32>
    %6 = arith.andi %4, %5 : vector<1x256xi32>
    %c16_i32 = arith.constant 16 : i32
    %7 = vector.broadcast %c16_i32 : i32 to vector<1x256xi32>
    %8 = arith.cmpi sge, %4, %7 : vector<1x256xi32>
    %c240_i32 = arith.constant 240 : i32
    %9 = vector.broadcast %c240_i32 : i32 to vector<1x256xi32>
    %10 = arith.cmpi slt, %4, %9 : vector<1x256xi32>
    %c1_i32 = arith.constant 1 : i32
    %11 = vector.broadcast %c1_i32 : i32 to vector<1x256xi32>
    %12 = arith.cmpi sge, %6, %11 : vector<1x256xi32>
    %c15_i32_2 = arith.constant 15 : i32
    %13 = vector.broadcast %c15_i32_2 : i32 to vector<1x256xi32>
    %14 = arith.cmpi slt, %6, %13 : vector<1x256xi32>
    %c17_i32 = arith.constant 17 : i32
    %15 = tpu.dynamic_rotate %3 by %c17_i32 dim 1 : vector<8x256xf32>, i32 -> vector<8x256xf32>
    %16 = arith.andi %8, %12 : vector<1x256xi1>
    %cst_3 = arith.constant 0.000000e+00 : f32
    %17 = vector.shape_cast %16 : vector<1x256xi1> to vector<1x256xi1>
    %18 = vector.broadcast %17 : vector<1x256xi1> to vector<8x256xi1>
    %19 = vector.broadcast %cst_3 : f32 to vector<8x256xf32>
    %20 = arith.select %18, %15, %19 : vector<8x256xi1>, vector<8x256xf32>
    %c0_4 = arith.constant 0 : index
    %c0_5 = arith.constant 0 : index
    %21 = vector.load %arg5[%c0_4, %c0_5] : memref<72x256xf32, #tpu.memory_space<vmem>>, vector<8x256xf32>
    tpu.vector_store %arg5[%c0_4, %c0_5], %20 {strides = array<i32>} : memref<72x256xf32, #tpu.memory_space<vmem>>, vector<8x256xf32>,
    %c16_i32_6 = arith.constant 16 : i32
    %22 = tpu.dynamic_rotate %3 by %c16_i32_6 dim 1 : vector<8x256xf32>, i32 -> vector<8x256xf32>
    %cst_7 = arith.constant 0.000000e+00 : f32
    %23 = vector.shape_cast %8 : vector<1x256xi1> to vector<1x256xi1>
    %24 = vector.broadcast %23 : vector<1x256xi1> to vector<8x256xi1>
    %25 = vector.broadcast %cst_7 : f32 to vector<8x256xf32>
    %26 = arith.select %24, %22, %25 : vector<8x256xi1>, vector<8x256xf32>
    %c8 = arith.constant 8 : index
    %c0_8 = arith.constant 0 : index
    %27 = vector.load %arg5[%c8, %c0_8] : memref<72x256xf32, #tpu.memory_space<vmem>>, vector<8x256xf32>
    tpu.vector_store %arg5[%c8, %c0_8], %26 {strides = array<i32>} : memref<72x256xf32, #tpu.memory_space<vmem>>, vector<8x256xf32>,
    %c15_i32_9 = arith.constant 15 : i32
    %28 = tpu.dynamic_rotate %3 by %c15_i32_9 dim 1 : vector<8x256xf32>, i32 -> vector<8x256xf32>
    %29 = arith.andi %8, %14 : vector<1x256xi1>
    %cst_10 = arith.constant 0.000000e+00 : f32
    %30 = vector.shape_cast %29 : vector<1x256xi1> to vector<1x256xi1>
    %31 = vector.broadcast %30 : vector<1x256xi1> to vector<8x256xi1>
    %32 = vector.broadcast %cst_10 : f32 to vector<8x256xf32>
    %33 = arith.select %31, %28, %32 : vector<8x256xi1>, vector<8x256xf32>
    %c16 = arith.constant 16 : index
    %c0_11 = arith.constant 0 : index
    %34 = vector.load %arg5[%c16, %c0_11] : memref<72x256xf32, #tpu.memory_space<vmem>>, vector<8x256xf32>
    tpu.vector_store %arg5[%c16, %c0_11], %33 {strides = array<i32>} : memref<72x256xf32, #tpu.memory_space<vmem>>, vector<8x256xf32>,
    %c1_i32_12 = arith.constant 1 : i32
    %35 = tpu.dynamic_rotate %3 by %c1_i32_12 dim 1 : vector<8x256xf32>, i32 -> vector<8x256xf32>
    %cst_13 = arith.constant 0.000000e+00 : f32
    %36 = vector.shape_cast %12 : vector<1x256xi1> to vector<1x256xi1>
    %37 = vector.broadcast %36 : vector<1x256xi1> to vector<8x256xi1>
    %38 = vector.broadcast %cst_13 : f32 to vector<8x256xf32>
    %39 = arith.select %37, %35, %38 : vector<8x256xi1>, vector<8x256xf32>
    %c24 = arith.constant 24 : index
    %c0_14 = arith.constant 0 : index
    %40 = vector.load %arg5[%c24, %c0_14] : memref<72x256xf32, #tpu.memory_space<vmem>>, vector<8x256xf32>
    tpu.vector_store %arg5[%c24, %c0_14], %39 {strides = array<i32>} : memref<72x256xf32, #tpu.memory_space<vmem>>, vector<8x256xf32>,
    %c32 = arith.constant 32 : index
    %c0_15 = arith.constant 0 : index
    %41 = vector.load %arg5[%c32, %c0_15] : memref<72x256xf32, #tpu.memory_space<vmem>>, vector<8x256xf32>
    tpu.vector_store %arg5[%c32, %c0_15], %3 {strides = array<i32>} : memref<72x256xf32, #tpu.memory_space<vmem>>, vector<8x256xf32>,
    %c255_i32 = arith.constant 255 : i32
    %42 = tpu.dynamic_rotate %3 by %c255_i32 dim 1 : vector<8x256xf32>, i32 -> vector<8x256xf32>
    %cst_16 = arith.constant 0.000000e+00 : f32
    %43 = vector.shape_cast %14 : vector<1x256xi1> to vector<1x256xi1>
    %44 = vector.broadcast %43 : vector<1x256xi1> to vector<8x256xi1>
    %45 = vector.broadcast %cst_16 : f32 to vector<8x256xf32>
    %46 = arith.select %44, %42, %45 : vector<8x256xi1>, vector<8x256xf32>
    %c40 = arith.constant 40 : index
    %c0_17 = arith.constant 0 : index
    %47 = vector.load %arg5[%c40, %c0_17] : memref<72x256xf32, #tpu.memory_space<vmem>>, vector<8x256xf32>
    tpu.vector_store %arg5[%c40, %c0_17], %46 {strides = array<i32>} : memref<72x256xf32, #tpu.memory_space<vmem>>, vector<8x256xf32>,
    %c241_i32 = arith.constant 241 : i32
    %48 = tpu.dynamic_rotate %3 by %c241_i32 dim 1 : vector<8x256xf32>, i32 -> vector<8x256xf32>
    %49 = arith.andi %10, %12 : vector<1x256xi1>
    %cst_18 = arith.constant 0.000000e+00 : f32
    %50 = vector.shape_cast %49 : vector<1x256xi1> to vector<1x256xi1>
    %51 = vector.broadcast %50 : vector<1x256xi1> to vector<8x256xi1>
    %52 = vector.broadcast %cst_18 : f32 to vector<8x256xf32>
    %53 = arith.select %51, %48, %52 : vector<8x256xi1>, vector<8x256xf32>
    %c48 = arith.constant 48 : index
    %c0_19 = arith.constant 0 : index
    %54 = vector.load %arg5[%c48, %c0_19] : memref<72x256xf32, #tpu.memory_space<vmem>>, vector<8x256xf32>
    tpu.vector_store %arg5[%c48, %c0_19], %53 {strides = array<i32>} : memref<72x256xf32, #tpu.memory_space<vmem>>, vector<8x256xf32>,
    %c240_i32_20 = arith.constant 240 : i32
    %55 = tpu.dynamic_rotate %3 by %c240_i32_20 dim 1 : vector<8x256xf32>, i32 -> vector<8x256xf32>
    %cst_21 = arith.constant 0.000000e+00 : f32
    %56 = vector.shape_cast %10 : vector<1x256xi1> to vector<1x256xi1>
    %57 = vector.broadcast %56 : vector<1x256xi1> to vector<8x256xi1>
    %58 = vector.broadcast %cst_21 : f32 to vector<8x256xf32>
    %59 = arith.select %57, %55, %58 : vector<8x256xi1>, vector<8x256xf32>
    %c56 = arith.constant 56 : index
    %c0_22 = arith.constant 0 : index
    %60 = vector.load %arg5[%c56, %c0_22] : memref<72x256xf32, #tpu.memory_space<vmem>>, vector<8x256xf32>
    tpu.vector_store %arg5[%c56, %c0_22], %59 {strides = array<i32>} : memref<72x256xf32, #tpu.memory_space<vmem>>, vector<8x256xf32>,
    %c239_i32 = arith.constant 239 : i32
    %61 = tpu.dynamic_rotate %3 by %c239_i32 dim 1 : vector<8x256xf32>, i32 -> vector<8x256xf32>
    %62 = arith.andi %10, %14 : vector<1x256xi1>
    %cst_23 = arith.constant 0.000000e+00 : f32
    %63 = vector.shape_cast %62 : vector<1x256xi1> to vector<1x256xi1>
    %64 = vector.broadcast %63 : vector<1x256xi1> to vector<8x256xi1>
    %65 = vector.broadcast %cst_23 : f32 to vector<8x256xf32>
    %66 = arith.select %64, %61, %65 : vector<8x256xi1>, vector<8x256xf32>
    %c64 = arith.constant 64 : index
    %c0_24 = arith.constant 0 : index
    %67 = vector.load %arg5[%c64, %c0_24] : memref<72x256xf32, #tpu.memory_space<vmem>>, vector<8x256xf32>
    tpu.vector_store %arg5[%c64, %c0_24], %66 {strides = array<i32>} : memref<72x256xf32, #tpu.memory_space<vmem>>, vector<8x256xf32>,
    %c0_25 = arith.constant 0 : index
    %c0_26 = arith.constant 0 : index
    %68 = vector.load %arg2[%c0_25, %c0_26] : memref<4x72xf32, #tpu.memory_space<vmem>>, vector<4x72xf32>
    %c0_27 = arith.constant 0 : index
    %c0_28 = arith.constant 0 : index
    %69 = vector.load %arg5[%c0_27, %c0_28] : memref<72x256xf32, #tpu.memory_space<vmem>>, vector<72x256xf32>
    %cst_29 = arith.constant dense<0.000000e+00> : vector<4x256xf32>
    %70 = tpu.matmul %68, %69, %cst_29 {dimension_numbers = #tpu.dot_dimension_numbers<[1], [0], [0], [1], [0, 0, 1, 1], [], []>} : vector<4x72xf32>, vector<72x256xf32>, vector<4x256xf32> -> vector<4x256xf32>
    %71 = arith.addf %1, %70 : vector<4x256xf32>
    %c0_30 = arith.constant 0 : index
    %c0_31 = arith.constant 0 : index
    %72 = vector.load %arg3[%c0_30, %c0_31] : memref<4x1xf32, #tpu.memory_space<vmem>>, vector<4x1xf32>
    %73 = vector.broadcast %72 : vector<4x1xf32> to vector<4x256xf32>
    %74 = arith.addf %71, %73 : vector<4x256xf32>
    %c0_32 = arith.constant 0 : index
    %c0_33 = arith.constant 0 : index
    %c0_34 = arith.constant 0 : index
    %75 = vector.load %arg4[%c0_32, %c0_33, %c0_34] : memref<1x4x256xf32, #tpu.memory_space<vmem>>, vector<1x4x256xf32>
    %76 = vector.shape_cast %75 : vector<1x4x256xf32> to vector<4x256xf32>
    %77 = vector.shape_cast %74 : vector<4x256xf32> to vector<1x4x256xf32>
    tpu.vector_store %arg4[%c0_32, %c0_33, %c0_34], %77 {strides = array<i32>} : memref<1x4x256xf32, #tpu.memory_space<vmem>>, vector<1x4x256xf32>,
    return
  }
  func.func @transform_0(%arg0: i32) -> (i32, i32, i32) {
    %c0_i32 = arith.constant 0 : i32
    %c0_i32_0 = arith.constant 0 : i32
    %c0_i32_1 = arith.constant 0 : i32
    return %arg0, %c0_i32, %c0_i32_0 : i32, i32, i32
  }
  func.func @transform_1(%arg0: i32) -> (i32, i32) {
    %c0_i32 = arith.constant 0 : i32
    %c0_i32_0 = arith.constant 0 : i32
    %c0_i32_1 = arith.constant 0 : i32
    return %c0_i32, %c0_i32_0 : i32, i32
  }
  func.func @transform_2(%arg0: i32) -> (i32, i32) {
    %c0_i32 = arith.constant 0 : i32
    %c0_i32_0 = arith.constant 0 : i32
    %c0_i32_1 = arith.constant 0 : i32
    return %c0_i32, %c0_i32_0 : i32, i32
  }
  func.func @transform_3(%arg0: i32) -> (i32, i32, i32) {
    %c0_i32 = arith.constant 0 : i32
    %c0_i32_0 = arith.constant 0 : i32
    %c0_i32_1 = arith.constant 0 : i32
    return %arg0, %c0_i32, %c0_i32_0 : i32, i32, i32
  }
}

module attributes {stable_mosaic.version = 11 : i64} {
  func.func @_shortcut_conv_kernel(%arg0: i32, %arg1: memref<1x4x256xf32, #tpu.memory_space<vmem>>, %arg2: memref<4x72xf32, #tpu.memory_space<vmem>>, %arg3: memref<4x1xf32, #tpu.memory_space<vmem>>, %arg4: memref<1x4x256xf32, #tpu.memory_space<vmem>>, %arg5: memref<72x256xf32, #tpu.memory_space<vmem>>) attributes {dimension_semantics = [#tpu.dimension_semantics<parallel>], iteration_bounds = array<i64: 2>, scalar_prefetch = 0 : i64, scratch_operands = 1 : i64, tpu.core_type = #tpu.core_type<tc>, window_params = [{transform_indices = @transform_0, window_bounds = array<i64: 1, 4, 256>}, {pipeline_mode = #tpu.pipeline_mode<synchronous>, transform_indices = @transform_1, window_bounds = array<i64: 4, 72>}, {pipeline_mode = #tpu.pipeline_mode<synchronous>, transform_indices = @transform_2, window_bounds = array<i64: 4, 1>}, {transform_indices = @transform_3, window_bounds = array<i64: 1, 4, 256>}]} {
    %c0 = arith.constant 0 : index
    %c0_0 = arith.constant 0 : index
    %c0_1 = arith.constant 0 : index
    %0 = vector.load %arg1[%c0, %c0_0, %c0_1] : memref<1x4x256xf32, #tpu.memory_space<vmem>>, vector<1x4x256xf32>
    %1 = vector.shape_cast %0 : vector<1x4x256xf32> to vector<4x256xf32>
    %cst = arith.constant 0.000000e+00 : f32
    %2 = vector.broadcast %cst : f32 to vector<4x256xf32>
    %3 = tpu.concatenate %1, %2 in 0 : vector<4x256xf32>, vector<4x256xf32> -> vector<8x256xf32>
    %4 = tpu.iota {dimensions = array<i32: 1>} : vector<1x256xi32>
    %c15_i32 = arith.constant 15 : i32
    %5 = vector.broadcast %c15_i32 : i32 to vector<1x256xi32>
    %6 = arith.andi %4, %5 : vector<1x256xi32>
    %c16_i32 = arith.constant 16 : i32
    %7 = vector.broadcast %c16_i32 : i32 to vector<1x256xi32>
    %8 = arith.cmpi sge, %4, %7 : vector<1x256xi32>
    %c240_i32 = arith.constant 240 : i32
    %9 = vector.broadcast %c240_i32 : i32 to vector<1x256xi32>
    %10 = arith.cmpi slt, %4, %9 : vector<1x256xi32>
    %c1_i32 = arith.constant 1 : i32
    %11 = vector.broadcast %c1_i32 : i32 to vector<1x256xi32>
    %12 = arith.cmpi sge, %6, %11 : vector<1x256xi32>
    %c15_i32_2 = arith.constant 15 : i32
    %13 = vector.broadcast %c15_i32_2 : i32 to vector<1x256xi32>
    %14 = arith.cmpi slt, %6, %13 : vector<1x256xi32>
    %c17_i32 = arith.constant 17 : i32
    %15 = tpu.dynamic_rotate %3 by %c17_i32 dim 1 : vector<8x256xf32>, i32 -> vector<8x256xf32>
    %16 = arith.andi %8, %12 : vector<1x256xi1>
    %cst_3 = arith.constant 0.000000e+00 : f32
    %17 = vector.shape_cast %16 : vector<1x256xi1> to vector<1x256xi1>
    %18 = vector.broadcast %17 : vector<1x256xi1> to vector<8x256xi1>
    %19 = vector.broadcast %cst_3 : f32 to vector<8x256xf32>
    %20 = arith.select %18, %15, %19 : vector<8x256xi1>, vector<8x256xf32>
    %c0_4 = arith.constant 0 : index
    %c0_5 = arith.constant 0 : index
    %21 = vector.load %arg5[%c0_4, %c0_5] : memref<72x256xf32, #tpu.memory_space<vmem>>, vector<8x256xf32>
    tpu.vector_store %arg5[%c0_4, %c0_5], %20 {strides = array<i32>} : memref<72x256xf32, #tpu.memory_space<vmem>>, vector<8x256xf32>,
    %c16_i32_6 = arith.constant 16 : i32
    %22 = tpu.dynamic_rotate %3 by %c16_i32_6 dim 1 : vector<8x256xf32>, i32 -> vector<8x256xf32>
    %cst_7 = arith.constant 0.000000e+00 : f32
    %23 = vector.shape_cast %8 : vector<1x256xi1> to vector<1x256xi1>
    %24 = vector.broadcast %23 : vector<1x256xi1> to vector<8x256xi1>
    %25 = vector.broadcast %cst_7 : f32 to vector<8x256xf32>
    %26 = arith.select %24, %22, %25 : vector<8x256xi1>, vector<8x256xf32>
    %c8 = arith.constant 8 : index
    %c0_8 = arith.constant 0 : index
    %27 = vector.load %arg5[%c8, %c0_8] : memref<72x256xf32, #tpu.memory_space<vmem>>, vector<8x256xf32>
    tpu.vector_store %arg5[%c8, %c0_8], %26 {strides = array<i32>} : memref<72x256xf32, #tpu.memory_space<vmem>>, vector<8x256xf32>,
    %c15_i32_9 = arith.constant 15 : i32
    %28 = tpu.dynamic_rotate %3 by %c15_i32_9 dim 1 : vector<8x256xf32>, i32 -> vector<8x256xf32>
    %29 = arith.andi %8, %14 : vector<1x256xi1>
    %cst_10 = arith.constant 0.000000e+00 : f32
    %30 = vector.shape_cast %29 : vector<1x256xi1> to vector<1x256xi1>
    %31 = vector.broadcast %30 : vector<1x256xi1> to vector<8x256xi1>
    %32 = vector.broadcast %cst_10 : f32 to vector<8x256xf32>
    %33 = arith.select %31, %28, %32 : vector<8x256xi1>, vector<8x256xf32>
    %c16 = arith.constant 16 : index
    %c0_11 = arith.constant 0 : index
    %34 = vector.load %arg5[%c16, %c0_11] : memref<72x256xf32, #tpu.memory_space<vmem>>, vector<8x256xf32>
    tpu.vector_store %arg5[%c16, %c0_11], %33 {strides = array<i32>} : memref<72x256xf32, #tpu.memory_space<vmem>>, vector<8x256xf32>,
    %c1_i32_12 = arith.constant 1 : i32
    %35 = tpu.dynamic_rotate %3 by %c1_i32_12 dim 1 : vector<8x256xf32>, i32 -> vector<8x256xf32>
    %cst_13 = arith.constant 0.000000e+00 : f32
    %36 = vector.shape_cast %12 : vector<1x256xi1> to vector<1x256xi1>
    %37 = vector.broadcast %36 : vector<1x256xi1> to vector<8x256xi1>
    %38 = vector.broadcast %cst_13 : f32 to vector<8x256xf32>
    %39 = arith.select %37, %35, %38 : vector<8x256xi1>, vector<8x256xf32>
    %c24 = arith.constant 24 : index
    %c0_14 = arith.constant 0 : index
    %40 = vector.load %arg5[%c24, %c0_14] : memref<72x256xf32, #tpu.memory_space<vmem>>, vector<8x256xf32>
    tpu.vector_store %arg5[%c24, %c0_14], %39 {strides = array<i32>} : memref<72x256xf32, #tpu.memory_space<vmem>>, vector<8x256xf32>,
    %c32 = arith.constant 32 : index
    %c0_15 = arith.constant 0 : index
    %41 = vector.load %arg5[%c32, %c0_15] : memref<72x256xf32, #tpu.memory_space<vmem>>, vector<8x256xf32>
    tpu.vector_store %arg5[%c32, %c0_15], %3 {strides = array<i32>} : memref<72x256xf32, #tpu.memory_space<vmem>>, vector<8x256xf32>,
    %c255_i32 = arith.constant 255 : i32
    %42 = tpu.dynamic_rotate %3 by %c255_i32 dim 1 : vector<8x256xf32>, i32 -> vector<8x256xf32>
    %cst_16 = arith.constant 0.000000e+00 : f32
    %43 = vector.shape_cast %14 : vector<1x256xi1> to vector<1x256xi1>
    %44 = vector.broadcast %43 : vector<1x256xi1> to vector<8x256xi1>
    %45 = vector.broadcast %cst_16 : f32 to vector<8x256xf32>
    %46 = arith.select %44, %42, %45 : vector<8x256xi1>, vector<8x256xf32>
    %c40 = arith.constant 40 : index
    %c0_17 = arith.constant 0 : index
    %47 = vector.load %arg5[%c40, %c0_17] : memref<72x256xf32, #tpu.memory_space<vmem>>, vector<8x256xf32>
    tpu.vector_store %arg5[%c40, %c0_17], %46 {strides = array<i32>} : memref<72x256xf32, #tpu.memory_space<vmem>>, vector<8x256xf32>,
    %c241_i32 = arith.constant 241 : i32
    %48 = tpu.dynamic_rotate %3 by %c241_i32 dim 1 : vector<8x256xf32>, i32 -> vector<8x256xf32>
    %49 = arith.andi %10, %12 : vector<1x256xi1>
    %cst_18 = arith.constant 0.000000e+00 : f32
    %50 = vector.shape_cast %49 : vector<1x256xi1> to vector<1x256xi1>
    %51 = vector.broadcast %50 : vector<1x256xi1> to vector<8x256xi1>
    %52 = vector.broadcast %cst_18 : f32 to vector<8x256xf32>
    %53 = arith.select %51, %48, %52 : vector<8x256xi1>, vector<8x256xf32>
    %c48 = arith.constant 48 : index
    %c0_19 = arith.constant 0 : index
    %54 = vector.load %arg5[%c48, %c0_19] : memref<72x256xf32, #tpu.memory_space<vmem>>, vector<8x256xf32>
    tpu.vector_store %arg5[%c48, %c0_19], %53 {strides = array<i32>} : memref<72x256xf32, #tpu.memory_space<vmem>>, vector<8x256xf32>,
    %c240_i32_20 = arith.constant 240 : i32
    %55 = tpu.dynamic_rotate %3 by %c240_i32_20 dim 1 : vector<8x256xf32>, i32 -> vector<8x256xf32>
    %cst_21 = arith.constant 0.000000e+00 : f32
    %56 = vector.shape_cast %10 : vector<1x256xi1> to vector<1x256xi1>
    %57 = vector.broadcast %56 : vector<1x256xi1> to vector<8x256xi1>
    %58 = vector.broadcast %cst_21 : f32 to vector<8x256xf32>
    %59 = arith.select %57, %55, %58 : vector<8x256xi1>, vector<8x256xf32>
    %c56 = arith.constant 56 : index
    %c0_22 = arith.constant 0 : index
    %60 = vector.load %arg5[%c56, %c0_22] : memref<72x256xf32, #tpu.memory_space<vmem>>, vector<8x256xf32>
    tpu.vector_store %arg5[%c56, %c0_22], %59 {strides = array<i32>} : memref<72x256xf32, #tpu.memory_space<vmem>>, vector<8x256xf32>,
    %c239_i32 = arith.constant 239 : i32
    %61 = tpu.dynamic_rotate %3 by %c239_i32 dim 1 : vector<8x256xf32>, i32 -> vector<8x256xf32>
    %62 = arith.andi %10, %14 : vector<1x256xi1>
    %cst_23 = arith.constant 0.000000e+00 : f32
    %63 = vector.shape_cast %62 : vector<1x256xi1> to vector<1x256xi1>
    %64 = vector.broadcast %63 : vector<1x256xi1> to vector<8x256xi1>
    %65 = vector.broadcast %cst_23 : f32 to vector<8x256xf32>
    %66 = arith.select %64, %61, %65 : vector<8x256xi1>, vector<8x256xf32>
    %c64 = arith.constant 64 : index
    %c0_24 = arith.constant 0 : index
    %67 = vector.load %arg5[%c64, %c0_24] : memref<72x256xf32, #tpu.memory_space<vmem>>, vector<8x256xf32>
    tpu.vector_store %arg5[%c64, %c0_24], %66 {strides = array<i32>} : memref<72x256xf32, #tpu.memory_space<vmem>>, vector<8x256xf32>,
    %c0_25 = arith.constant 0 : index
    %c0_26 = arith.constant 0 : index
    %68 = vector.load %arg2[%c0_25, %c0_26] : memref<4x72xf32, #tpu.memory_space<vmem>>, vector<4x72xf32>
    %c0_27 = arith.constant 0 : index
    %c0_28 = arith.constant 0 : index
    %69 = vector.load %arg5[%c0_27, %c0_28] : memref<72x256xf32, #tpu.memory_space<vmem>>, vector<72x256xf32>
    %cst_29 = arith.constant dense<0.000000e+00> : vector<4x256xf32>
    %70 = tpu.matmul %68, %69, %cst_29 {dimension_numbers = #tpu.dot_dimension_numbers<[1], [0], [0], [1], [0, 0, 1, 1], [], []>} : vector<4x72xf32>, vector<72x256xf32>, vector<4x256xf32> -> vector<4x256xf32>
    %71 = arith.addf %1, %70 : vector<4x256xf32>
    %c0_30 = arith.constant 0 : index
    %c0_31 = arith.constant 0 : index
    %72 = vector.load %arg3[%c0_30, %c0_31] : memref<4x1xf32, #tpu.memory_space<vmem>>, vector<4x1xf32>
    %73 = vector.broadcast %72 : vector<4x1xf32> to vector<4x256xf32>
    %74 = arith.addf %71, %73 : vector<4x256xf32>
    %c0_32 = arith.constant 0 : index
    %c0_33 = arith.constant 0 : index
    %c0_34 = arith.constant 0 : index
    %75 = vector.load %arg4[%c0_32, %c0_33, %c0_34] : memref<1x4x256xf32, #tpu.memory_space<vmem>>, vector<1x4x256xf32>
    %76 = vector.shape_cast %75 : vector<1x4x256xf32> to vector<4x256xf32>
    %77 = vector.shape_cast %74 : vector<4x256xf32> to vector<1x4x256xf32>
    tpu.vector_store %arg4[%c0_32, %c0_33, %c0_34], %77 {strides = array<i32>} : memref<1x4x256xf32, #tpu.memory_space<vmem>>, vector<1x4x256xf32>,
    return
  }
  func.func @transform_0(%arg0: i32) -> (i32, i32, i32) {
    %c0_i32 = arith.constant 0 : i32
    %c0_i32_0 = arith.constant 0 : i32
    %c0_i32_1 = arith.constant 0 : i32
    return %arg0, %c0_i32, %c0_i32_0 : i32, i32, i32
  }
  func.func @transform_1(%arg0: i32) -> (i32, i32) {
    %c0_i32 = arith.constant 0 : i32
    %c0_i32_0 = arith.constant 0 : i32
    %c0_i32_1 = arith.constant 0 : i32
    return %c0_i32, %c0_i32_0 : i32, i32
  }
  func.func @transform_2(%arg0: i32) -> (i32, i32) {
    %c0_i32 = arith.constant 0 : i32
    %c0_i32_0 = arith.constant 0 : i32
    %c0_i32_1 = arith.constant 0 : i32
    return %c0_i32, %c0_i32_0 : i32, i32
  }
  func.func @transform_3(%arg0: i32) -> (i32, i32, i32) {
    %c0_i32 = arith.constant 0 : i32
    %c0_i32_0 = arith.constant 0 : i32
    %c0_i32_1 = arith.constant 0 : i32
    return %arg0, %c0_i32, %c0_i32_0 : i32, i32, i32
  }
}

</mosaic_0001>

<llo_original>
// kernel: tpu_custom_call.1
$region0: #{tpu_custom_call.1}
  #allocation0 [shape = 'u32[]', space=smem, size = 0x4, offset = 0x4, fixed_abs, tag = 'smem constant byte address 0x4 - core index']
  #allocation1 [shape = 'u32[72,128]{1,0:T(1,128)}', space=vmem, size = 0x9000, scoped, tag = 'internal scratch']
  #allocation2 [shape = 'f32[72,256]{1,0:T(8,128)}', space=vmem, size = 0x12000, scoped, tag = 'scratch operand']
  %s0 = inlined_call_operand.hbm [shape: f32[2,4,256], index: 0, kind: input, shape index: {}]
  %s1 = inlined_call_operand.vmem [shape: f32[4,72], index: 1, kind: input, shape index: {}]
  %s2 = inlined_call_operand.vmem [shape: f32[4,1], index: 2, kind: input, shape index: {}]
  %s3 = inlined_call_operand.hbm [shape: f32[2,4,256], index: 3, kind: output, shape index: {}]
  %s4 = sld [smem:[#allocation0]]
  $region49: #{tpu_custom_call.1} parent=0
    _
  %s6 = ssub.s32 1, %s4
  %s7 = scalar_select 0, %s6, %s4
  $region1: #{tpu_custom_call.1} parent=0
    #allocation3 [shape = 'u8[8192]{0}', space=vmem, size = 0x2000, scoped, tag = 'input window, operand 0']
    #allocation4 [shape = 's32[2]{0}', space=sflag, size = 0x8, scoped, tag = 'scoped memory for tpu_custom_call.1']
    #allocation5 [shape = 's32[2]{0}', space=sflag, size = 0x8, scoped, tag = 'scoped memory for tpu_custom_call.1']
    #allocation6 [shape = 'u8[8192]{0}', space=vmem, size = 0x2000, scoped, tag = 'output window, operand 0']
    %8 = vsyncpa [#allocation4], 0
    %s9 = scalar_lea.sflag [#allocation4], 1
    %10 = vsyncpa %s9, 0
    %11 = vsyncpa [#allocation5], 0
    %s12 = scalar_lea.sflag [#allocation5], 1
    %13 = vsyncpa %s12, 0
    loop: start=0, step=1, limit=4
    $region2: #{tpu_custom_call.1} parent=1 // loop_pre_header
      _
    $region3: #{tpu_custom_call.1} parent=1 // loop_header
      %s15 = sphi 0, %s19
      %p16 = scmp.ge.s32.totalorder %s15, 4
      %s25 = sphi 0, %s27
      %s28 = sphi 0, %s25
      %s29 = sphi 0, %s28
      %s45 = sphi 0, %s29
      %s49 = sphi 0, %s49
      %s51 = sphi 0, %s49
      %s52 = sphi 0, %s51
      %s66 = sphi 0, %s52
      %s70 = sphi 0, %s70
      %s72 = sphi 0, %s70
      %s73 = sphi 0, %s72
      %s87 = sphi 0, %s73
      %s93 = sphi 0, %s95
      %s96 = sphi 0, %s93
      %s97 = sphi 0, %s96
      %s113 = sphi 0, %s97
    $region4: #{tpu_custom_call.1} parent=1 // loop_header_branch
      %18 = sbr.rel (%p16) target = $region8
    $region5: #{tpu_custom_call.1} parent=1 // loop_body
      %s20 = ssub.s32 %s15, 1
      %s21 = ssub.s32 %s15, 2
      %s22 = sadd.s32 %s15, 1
      %s23 = ssub.s32 %s15, %s22
      %p24 = scmp.eq.s32.totalorder %s23, 0
      %s26 = sadd.s32 %s25, 1
      %s27 = scalar_select %p24, %s25, %s26
      %p30 = pneg %p24
      %p31 = scmp.eq.s32.totalorder %s15, 1
      %p32 = por %p30, %p31
      %p33 = scmp.ne.s32.totalorder %s25, %s28
      %p34 = scmp.eq.s32.totalorder %s15, 0
      %p35 = por %p33, %p34
      %p36 = scmp.ne.s32.totalorder %s25, %s28
      %p37 = scmp.eq.s32.totalorder %s20, 1
      %p38 = por %p36, %p37
      %p39 = scmp.ne.s32.totalorder %s28, %s29
      %p40 = scmp.eq.s32.totalorder %s20, 0
      %p41 = por %p39, %p40
      %p42 = scmp.ne.s32.totalorder %s28, %s29
      %p43 = scmp.eq.s32.totalorder %s21, 1
      %p44 = por %p42, %p43
      %p46 = scmp.ne.s32.totalorder %s29, %s45
      %p47 = scmp.eq.s32.totalorder %s21, 0
      %p48 = por %p46, %p47
      %s50 = sadd.s32 %s49, 1
      %p53 = scmp.eq.s32.totalorder %s15, 1
      %p54 = scmp.ne.s32.totalorder %s49, %s51
      %p55 = scmp.eq.s32.totalorder %s15, 0
      %p56 = por %p54, %p55
      %p57 = scmp.ne.s32.totalorder %s49, %s51
      %p58 = scmp.eq.s32.totalorder %s20, 1
      %p59 = por %p57, %p58
      %p60 = scmp.ne.s32.totalorder %s51, %s52
      %p61 = scmp.eq.s32.totalorder %s20, 0
      %p62 = por %p60, %p61
      %p63 = scmp.ne.s32.totalorder %s51, %s52
      %p64 = scmp.eq.s32.totalorder %s21, 1
      %p65 = por %p63, %p64
      %p67 = scmp.ne.s32.totalorder %s52, %s66
      %p68 = scmp.eq.s32.totalorder %s21, 0
      %p69 = por %p67, %p68
      %s71 = sadd.s32 %s70, 1
      %p74 = scmp.eq.s32.totalorder %s15, 1
      %p75 = scmp.ne.s32.totalorder %s70, %s72
      %p76 = scmp.eq.s32.totalorder %s15, 0
      %p77 = por %p75, %p76
      %p78 = scmp.ne.s32.totalorder %s70, %s72
      %p79 = scmp.eq.s32.totalorder %s20, 1
      %p80 = por %p78, %p79
      %p81 = scmp.ne.s32.totalorder %s72, %s73
      %p82 = scmp.eq.s32.totalorder %s20, 0
      %p83 = por %p81, %p82
      %p84 = scmp.ne.s32.totalorder %s72, %s73
      %p85 = scmp.eq.s32.totalorder %s21, 1
      %p86 = por %p84, %p85
      %p88 = scmp.ne.s32.totalorder %s73, %s87
      %p89 = scmp.eq.s32.totalorder %s21, 0
      %p90 = por %p88, %p89
      %s91 = ssub.s32 %s15, %s22
      %p92 = scmp.eq.s32.totalorder %s91, 0
      %s94 = sadd.s32 %s93, 1
      %s95 = scalar_select %p92, %s93, %s94
      %p98 = pneg %p92
      %p99 = scmp.eq.s32.totalorder %s15, 1
      %p100 = por %p98, %p99
      %p101 = scmp.ne.s32.totalorder %s93, %s96
      %p102 = scmp.eq.s32.totalorder %s15, 0
      %p103 = por %p101, %p102
      %p104 = scmp.ne.s32.totalorder %s93, %s96
      %p105 = scmp.eq.s32.totalorder %s20, 1
      %p106 = por %p104, %p105
      %p107 = scmp.ne.s32.totalorder %s96, %s97
      %p108 = scmp.eq.s32.totalorder %s20, 0
      %p109 = por %p107, %p108
      %p110 = scmp.ne.s32.totalorder %s96, %s97
      %p111 = scmp.eq.s32.totalorder %s21, 1
      %p112 = por %p110, %p111
      %p114 = scmp.ne.s32.totalorder %s97, %s113
      %p115 = scmp.eq.s32.totalorder %s21, 0
      %p116 = por %p114, %p115
      %p117 = scmp.le.s32.totalorder 1, %s15
      %p118 = scmp.lt.s32.totalorder %s15, 3
      %p119 = pnand %p117, %p118
      %p120 = pneg %p119
      // Predicated region
      $region9: #{tpu_custom_call.1} parent=5 // pred_check
        _
      $region10: #{tpu_custom_call.1} parent=5 // pred_check_branch
        %122 = sbr.rel (%p119) target = $region12
      $region11: #{tpu_custom_call.1} parent=5 // pred_region
        %s123 = ssub.s32 %s15, 1
        // Predicated region
        $region13: #{tpu_custom_call.1} parent=11 // pred_check
          %p124 = pneg %p62
        $region14: #{tpu_custom_call.1} parent=11 // pred_check_branch
          %126 = sbr.rel (%p124) target = $region16
        $region15: #{tpu_custom_call.1} parent=11 // pred_region
          _
        $region16: #{tpu_custom_call.1} parent=11 // pred_fallthru
          _
        // Predicated region
        $region17: #{tpu_custom_call.1} parent=11 // pred_check
          %p127 = pneg %p83
        $region18: #{tpu_custom_call.1} parent=11 // pred_check_branch
          %129 = sbr.rel (%p127) target = $region20
        $region19: #{tpu_custom_call.1} parent=11 // pred_region
          _
        $region20: #{tpu_custom_call.1} parent=11 // pred_fallthru
          _
      $region12: #{tpu_custom_call.1} parent=5 // pred_fallthru
        _
      %p130 = scmp.lt.s32.totalorder %s15, 2
      // Predicated region
      $region21: #{tpu_custom_call.1} parent=5 // pred_check
        %p131 = pneg %p130
      $region22: #{tpu_custom_call.1} parent=5 // pred_check_branch
        %133 = sbr.rel (%p131) target = $region24
      $region23: #{tpu_custom_call.1} parent=5 // pred_region
        // Predicated region
        $region25: #{tpu_custom_call.1} parent=23 // pred_check
          %p134 = pneg %p35
        $region26: #{tpu_custom_call.1} parent=23 // pred_check_branch
          %136 = sbr.rel (%p134) target = $region28
        $region27: #{tpu_custom_call.1} parent=23 // pred_region
          %s137 = sand.u32 %s25, 1
          %s138 = scalar_lea.sflag [#allocation4], %s137
          %s139 = sand.u32 %s25, 1
          %s140 = smul.addr %s139, 8
          %s141 = scalar_lea.vmem [#allocation3], %s140
          %143 = vsyncadd %s138, 0
          %s144 = smul.addr %s15, 2
          %s145 = smul.addr %s144, 4
          %s146 = scalar_lea.hbm %s0, %s145
          %s148 = sshll.u32 %s146, 4
          %s149 = int_to_ptr.hbm [resolvable:$true] %s148
          %s150 = sshll.u32 %s141, 4
          %s151 = int_to_ptr.vmem [resolvable:$true] %s150
          %153 = dma.hbm_to_vmem [thread:$0]  %s149, 128, %s151, %s138
        $region28: #{tpu_custom_call.1} parent=23 // pred_fallthru
          _
      $region24: #{tpu_custom_call.1} parent=5 // pred_fallthru
        _
      %p154 = scmp.le.s32.totalorder 1, %s15
      %p155 = scmp.lt.s32.totalorder %s15, 3
      %p156 = pnand %p154, %p155
      %p157 = pneg %p156
      // Predicated region
      $region29: #{tpu_custom_call.1} parent=5 // pred_check
        _
      $region30: #{tpu_custom_call.1} parent=5 // pred_check_branch
        %159 = sbr.rel (%p156) target = $region32
      $region31: #{tpu_custom_call.1} parent=5 // pred_region
        %s160 = ssub.s32 %s15, 1
        %s161 = sand.u32 %s28, 1
        %s162 = scalar_lea.sflag [#allocation4], %s161
        %s163 = sand.u32 %s28, 1
        %s164 = smul.addr %s163, 8
        %s165 = scalar_lea.vmem [#allocation3], %s164
        // Predicated region
        $region33: #{tpu_custom_call.1} parent=31 // pred_check
          %p166 = pneg %p41
        $region34: #{tpu_custom_call.1} parent=31 // pred_check_branch
          %168 = sbr.rel (%p166) target = $region36
        $region35: #{tpu_custom_call.1} parent=31 // pred_region
          %170 = dma.done %s162, 128
        $region36: #{tpu_custom_call.1} parent=31 // pred_fallthru
          _
        %s171 = sand.u32 %s28, 1
        %s172 = scalar_lea.sflag [#allocation4], %s171
        %s173 = sand.u32 %s28, 1
        %s174 = smul.addr %s173, 8
        %s175 = scalar_lea.vmem [#allocation3], %s174
        %p176 = pneg %p41
        %p177 = pneg %p38
        %p178 = pneg %p62
        %p179 = pneg %p59
        %p180 = pneg %p83
        %p181 = pneg %p80
        %p182 = pneg %p109
        %p183 = pneg %p106
        %s184 = sand.u32 %s96, 1
        %s185 = scalar_lea.sflag [#allocation5], %s184
        %s186 = sand.u32 %s96, 1
        %s187 = smul.addr %s186, 8
        %s188 = scalar_lea.vmem [#allocation6], %s187
        %v189 = vld [vmem:[%s165] sm:$0xff]
        %191 = vst [vmem:[#allocation1] ss:$2 sm:$0xff] %v189
        %v192 = vld.sshfl [vmem:[#allocation1] sm:$0xff pattern:$0x75316420]
        %v193 = vld.sshfl [vmem:[#allocation1 + $0x8] sm:$0xff pattern:$0x75316420]
        %vm196 = vcmask 1043456
        %v197 = vsel %vm196, %v192, 0.0
        %v198 = vsel %vm196, %v193, 0.0
        %v199 = vlaneseq
        %v200 = vand.u32 %v199, 127
        %v201 = vadd.s32 %v200, 128
        %v202 = vand.u32 %v200, 15
        %v203 = vand.u32 %v201, 15
        %vm204 = vcmp.ge.s32.totalorder %v200, 16
        %vm205 = vcmp.ge.s32.totalorder %v201, 16
        %vm206 = vcmp.lt.s32.totalorder %v200, 240
        %vm207 = vcmp.lt.s32.totalorder %v201, 240
        %vm208 = vcmp.ge.s32.totalorder %v202, 1
        %vm209 = vcmp.ge.s32.totalorder %v203, 1
        %vm210 = vcmp.lt.s32.totalorder %v202, 15
        %vm211 = vcmp.lt.s32.totalorder %v203, 15
        %212 = vrot.lane.b32.xlu0 %v197, 17
        %v213 = vpop.permute.xlu0 %212
        %214 = vrot.lane.b32.xlu0 %v198, 17
        %v215 = vpop.permute.xlu0 %214
        %vm216 = vcmp.lt.s32.totalorder %v200, 17
        %v217 = vsel %vm216, %v213, %v215
        %v218 = vsel %vm216, %v215, %v213
        %vm219 = vmand %vm204, %vm208
        %vm220 = vmand %vm205, %vm209
        %v221 = vsel %vm219, 1, 0
        %v222 = vsel %vm220, 1, 0
        %vm223 = vcmp.eq.s32.totalorder %v221, 1
        %vm224 = vcmp.eq.s32.totalorder %v222, 1
        %v225 = vsel %vm223, %v218, 0.0
        %v226 = vsel %vm224, %v217, 0.0
        %227 = vst [vmem:[#allocation2] sm:$0xff] %v225
        %228 = vst [vmem:[#allocation2 + $0x8] sm:$0xff] %v226
        %229 = vrot.lane.b32.xlu0 %v197, 16
        %v230 = vpop.permute.xlu0 %229
        %231 = vrot.lane.b32.xlu0 %v198, 16
        %v232 = vpop.permute.xlu0 %231
        %vm233 = vcmp.lt.s32.totalorder %v200, 16
        %v234 = vsel %vm233, %v230, %v232
        %v235 = vsel %vm233, %v232, %v230
        %v236 = vsel %vm204, 1, 0
        %v237 = vsel %vm205, 1, 0
        %vm238 = vcmp.eq.s32.totalorder %v236, 1
        %vm239 = vcmp.eq.s32.totalorder %v237, 1
        %v240 = vsel %vm238, %v235, 0.0
        %v241 = vsel %vm239, %v234, 0.0
        %242 = vst [vmem:[#allocation2 + $0x10] sm:$0xff] %v240
        %243 = vst [vmem:[#allocation2 + $0x18] sm:$0xff] %v241
        %244 = vrot.lane.b32.xlu0 %v197, 15
        %v245 = vpop.permute.xlu0 %244
        %246 = vrot.lane.b32.xlu0 %v198, 15
        %v247 = vpop.permute.xlu0 %246
        %vm248 = vcmp.lt.s32.totalorder %v200, 15
        %v249 = vsel %vm248, %v245, %v247
        %v250 = vsel %vm248, %v247, %v245
        %vm251 = vmand %vm204, %vm210
        %vm252 = vmand %vm205, %vm211
        %v253 = vsel %vm251, 1, 0
        %v254 = vsel %vm252, 1, 0
        %vm255 = vcmp.eq.s32.totalorder %v253, 1
        %vm256 = vcmp.eq.s32.totalorder %v254, 1
        %v257 = vsel %vm255, %v250, 0.0
        %v258 = vsel %vm256, %v249, 0.0
        %259 = vst [vmem:[#allocation2 + $0x20] sm:$0xff] %v257
        %260 = vst [vmem:[#allocation2 + $0x28] sm:$0xff] %v258
        %261 = vrot.lane.b32.xlu0 %v197, 1
        %v262 = vpop.permute.xlu0 %261
        %263 = vrot.lane.b32.xlu0 %v198, 1
        %v264 = vpop.permute.xlu0 %263
        %vm265 = vcmp.lt.s32.totalorder %v200, 1
        %v266 = vsel %vm265, %v262, %v264
        %v267 = vsel %vm265, %v264, %v262
        %v268 = vsel %vm208, 1, 0
        %v269 = vsel %vm209, 1, 0
        %vm270 = vcmp.eq.s32.totalorder %v268, 1
        %vm271 = vcmp.eq.s32.totalorder %v269, 1
        %v272 = vsel %vm270, %v267, 0.0
        %v273 = vsel %vm271, %v266, 0.0
        %274 = vst [vmem:[#allocation2 + $0x30] sm:$0xff] %v272
        %275 = vst [vmem:[#allocation2 + $0x38] sm:$0xff] %v273
        %276 = vst [vmem:[#allocation2 + $0x40] sm:$0xff] %v197
        %277 = vst [vmem:[#allocation2 + $0x48] sm:$0xff] %v198
        %278 = vrot.lane.b32.xlu0 %v197, 127
        %v279 = vpop.permute.xlu0 %278
        %280 = vrot.lane.b32.xlu0 %v198, 127
        %v281 = vpop.permute.xlu0 %280
        %vm282 = vcmp.lt.s32.totalorder %v200, 127
        %v283 = vsel %vm282, %v279, %v281
        %v284 = vsel %vm282, %v281, %v279
        %v285 = vsel %vm210, 1, 0
        %v286 = vsel %vm211, 1, 0
        %vm287 = vcmp.eq.s32.totalorder %v285, 1
        %vm288 = vcmp.eq.s32.totalorder %v286, 1
        %v289 = vsel %vm287, %v283, 0.0
        %v290 = vsel %vm288, %v284, 0.0
        %291 = vst [vmem:[#allocation2 + $0x50] sm:$0xff] %v289
        %292 = vst [vmem:[#allocation2 + $0x58] sm:$0xff] %v290
        %293 = vrot.lane.b32.xlu0 %v197, 113
        %v294 = vpop.permute.xlu0 %293
        %295 = vrot.lane.b32.xlu0 %v198, 113
        %v296 = vpop.permute.xlu0 %295
        %vm297 = vcmp.lt.s32.totalorder %v200, 113
        %v298 = vsel %vm297, %v294, %v296
        %v299 = vsel %vm297, %v296, %v294
        %vm300 = vmand %vm206, %vm208
        %vm301 = vmand %vm207, %vm209
        %v302 = vsel %vm300, 1, 0
        %v303 = vsel %vm301, 1, 0
        %vm304 = vcmp.eq.s32.totalorder %v302, 1
        %vm305 = vcmp.eq.s32.totalorder %v303, 1
        %v306 = vsel %vm304, %v298, 0.0
        %v307 = vsel %vm305, %v299, 0.0
        %308 = vst [vmem:[#allocation2 + $0x60] sm:$0xff] %v306
        %309 = vst [vmem:[#allocation2 + $0x68] sm:$0xff] %v307
        %310 = vrot.lane.b32.xlu0 %v197, 112
        %v311 = vpop.permute.xlu0 %310
        %312 = vrot.lane.b32.xlu0 %v198, 112
        %v313 = vpop.permute.xlu0 %312
        %vm314 = vcmp.lt.s32.totalorder %v200, 112
        %v315 = vsel %vm314, %v311, %v313
        %v316 = vsel %vm314, %v313, %v311
        %v317 = vsel %vm206, 1, 0
        %v318 = vsel %vm207, 1, 0
        %vm319 = vcmp.eq.s32.totalorder %v317, 1
        %vm320 = vcmp.eq.s32.totalorder %v318, 1
        %v321 = vsel %vm319, %v315, 0.0
        %v322 = vsel %vm320, %v316, 0.0
        %323 = vst [vmem:[#allocation2 + $0x70] sm:$0xff] %v321
        %324 = vst [vmem:[#allocation2 + $0x78] sm:$0xff] %v322
        %325 = vrot.lane.b32.xlu0 %v197, 111
        %v326 = vpop.permute.xlu0 %325
        %327 = vrot.lane.b32.xlu0 %v198, 111
        %v328 = vpop.permute.xlu0 %327
        %vm329 = vcmp.lt.s32.totalorder %v200, 111
        %v330 = vsel %vm329, %v326, %v328
        %v331 = vsel %vm329, %v328, %v326
        %vm332 = vmand %vm206, %vm210
        %vm333 = vmand %vm207, %vm211
        %v334 = vsel %vm332, 1, 0
        %v335 = vsel %vm333, 1, 0
        %vm336 = vcmp.eq.s32.totalorder %v334, 1
        %vm337 = vcmp.eq.s32.totalorder %v335, 1
        %v338 = vsel %vm336, %v330, 0.0
        %v339 = vsel %vm337, %v331, 0.0
        %340 = vst [vmem:[#allocation2 + $0x80] sm:$0xff] %v338
        %341 = vst [vmem:[#allocation2 + $0x88] sm:$0xff] %v339
        %v342 = vld [vmem:[%s1] sm:$0xf]
        %v343 = vld [vmem:[#allocation2] sm:$0xff]
        %v344 = vld [vmem:[#allocation2 + $0x8] sm:$0xff]
        %v345 = vld [vmem:[#allocation2 + $0x10] sm:$0xff]
        %v346 = vld [vmem:[#allocation2 + $0x18] sm:$0xff]
        %v347 = vld [vmem:[#allocation2 + $0x20] sm:$0xff]
        %v348 = vld [vmem:[#allocation2 + $0x28] sm:$0xff]
        %v349 = vld [vmem:[#allocation2 + $0x30] sm:$0xff]
        %v350 = vld [vmem:[#allocation2 + $0x38] sm:$0xff]
        %v351 = vld [vmem:[#allocation2 + $0x40] sm:$0xff]
        %v352 = vld [vmem:[#allocation2 + $0x48] sm:$0xff]
        %v353 = vld [vmem:[#allocation2 + $0x50] sm:$0xff]
        %v354 = vld [vmem:[#allocation2 + $0x58] sm:$0xff]
        %v355 = vld [vmem:[#allocation2 + $0x60] sm:$0xff]
        %v356 = vld [vmem:[#allocation2 + $0x68] sm:$0xff]
        %v357 = vld [vmem:[#allocation2 + $0x70] sm:$0xff]
        %v358 = vld [vmem:[#allocation2 + $0x78] sm:$0xff]
        %v359 = vld [vmem:[#allocation2 + $0x80] sm:$0xff]
        %v360 = vld [vmem:[#allocation2 + $0x88] sm:$0xff]
        %vm361 = vcmask 588800
        %v363 = vsel %vm361, %v342, 0
        %365 = vmatpush.msra.mxu0 0.0
        %366 = vmatpush.msra.mxu0 0.0
        %367 = vmatpush.msra.mxu0 0.0
        %368 = vmatpush.msra.mxu0 0.0
        %369 = vmatpush.msra.mxu0 0.0
        %370 = vmatpush.msra.mxu0 0.0
        %371 = vmatpush.msra.mxu0 0.0
        %372 = vmatpush.msra.mxu0 %v359
        %373 = vmatpush.msra.mxu0 %v357
        %374 = vmatpush.msra.mxu0 %v355
        %375 = vmatpush.msra.mxu0 %v353
        %376 = vmatpush.msra.mxu0 %v351
        %377 = vmatpush.msra.mxu0 %v349
        %378 = vmatpush.msra.mxu0 %v347
        %379 = vmatpush.msra.mxu0 %v345
        %380 = vmatpush.msra.mxu0 %v343
        %381 = vmatmul.f32.gmra.mxu0 %v363
        %v382 = vpop.f32.mrf.mxu0
        %v383 = vadd.f32 0.0, %v382
        %384 = vdwg.mxu0
        %385 = vmatpush.msra.mxu0 0.0
        %386 = vmatpush.msra.mxu0 0.0
        %387 = vmatpush.msra.mxu0 0.0
        %388 = vmatpush.msra.mxu0 0.0
        %389 = vmatpush.msra.mxu0 0.0
        %390 = vmatpush.msra.mxu0 0.0
        %391 = vmatpush.msra.mxu0 0.0
        %392 = vmatpush.msra.mxu0 %v360
        %393 = vmatpush.msra.mxu0 %v358
        %394 = vmatpush.msra.mxu0 %v356
        %395 = vmatpush.msra.mxu0 %v354
        %396 = vmatpush.msra.mxu0 %v352
        %397 = vmatpush.msra.mxu0 %v350
        %398 = vmatpush.msra.mxu0 %v348
        %399 = vmatpush.msra.mxu0 %v346
        %400 = vmatpush.msra.mxu0 %v344
        %401 = vmatmul.f32.gmra.mxu0 %v363
        %v402 = vpop.f32.mrf.mxu0
        %v403 = vadd.f32 0.0, %v402
        %404 = vdwg.mxu0
        %v407 = vrot.slane %v403, 4
        %v408 = vsel %vm196, %v383, %v407
        %v410 = vadd.f32 %v189, %v408
        %v411 = vld [vmem:[%s2] sm:$0xf]
        %413 = vset.pattern.permute.xlu0 0
        %414 = vperm.xlu0 %413, %v411
        %v415 = vpop.permute.xlu0 %414
        %v417 = vunpack.c.l.s4 839922192
        %v418 = vunpack.c.0.s8 %v417
        %v419 = vperm.slane %v415, %v418
        %v421 = vadd.f32 %v410, %v419
        %422 = vst [vmem:[%s188] sm:$0xff] %v421
        %s423 = sand.u32 %s96, 1
        %s424 = scalar_lea.sflag [#allocation5], %s423
        %s425 = sand.u32 %s96, 1
        %s426 = smul.addr %s425, 8
        %s427 = scalar_lea.vmem [#allocation6], %s426
        // Predicated region
        $region37: #{tpu_custom_call.1} parent=31 // pred_check
          %p428 = pneg %p106
        $region38: #{tpu_custom_call.1} parent=31 // pred_check_branch
          %430 = sbr.rel (%p428) target = $region40
        $region39: #{tpu_custom_call.1} parent=31 // pred_region
          %432 = vsyncadd %s424, 0
          %s433 = smul.addr %s20, 2
          %s434 = smul.addr %s433, 4
          %s435 = scalar_lea.hbm %s3, %s434
          %s437 = sshll.u32 %s427, 4
          %s438 = int_to_ptr.vmem [resolvable:$true] %s437
          %s439 = sshll.u32 %s435, 4
          %s440 = int_to_ptr.hbm [resolvable:$true] %s439
          %442 = dma.vmem_to_hbm [thread:$0]  %s438, 128, %s440, %s424
        $region40: #{tpu_custom_call.1} parent=31 // pred_fallthru
          _
      $region32: #{tpu_custom_call.1} parent=5 // pred_fallthru
        _
      %p443 = scmp.le.s32.totalorder 2, %s15
      // Predicated region
      $region41: #{tpu_custom_call.1} parent=5 // pred_check
        %p444 = pneg %p443
      $region42: #{tpu_custom_call.1} parent=5 // pred_check_branch
        %446 = sbr.rel (%p444) target = $region44
      $region43: #{tpu_custom_call.1} parent=5 // pred_region
        %s447 = ssub.s32 %s15, 2
        // Predicated region
        $region45: #{tpu_custom_call.1} parent=43 // pred_check
          %p448 = pneg %p112
        $region46: #{tpu_custom_call.1} parent=43 // pred_check_branch
          %450 = sbr.rel (%p448) target = $region48
        $region47: #{tpu_custom_call.1} parent=43 // pred_region
          %s451 = sand.u32 %s97, 1
          %s452 = scalar_lea.sflag [#allocation5], %s451
          %s453 = sand.u32 %s97, 1
          %s454 = smul.addr %s453, 8
          %s455 = scalar_lea.vmem [#allocation6], %s454
          %457 = dma.done %s452, 128
        $region48: #{tpu_custom_call.1} parent=43 // pred_fallthru
          _
      $region44: #{tpu_custom_call.1} parent=5 // pred_fallthru
        _
    $region6: #{tpu_custom_call.1} parent=1 // loop_footer
      %s19 = sadd.s32 1, %s15
    $region7: #{tpu_custom_call.1} parent=1 // loop_footer_branch
      %14 = sbr.rel target = $region3
    $region8: #{tpu_custom_call.1} parent=1 // loop_exit
      _
    %458 = vsyncpa [#allocation4], 1
    %s459 = scalar_lea.sflag [#allocation4], 1
    %460 = vsyncpa %s459, 1
    %461 = vsyncpa [#allocation5], 1
    %s462 = scalar_lea.sflag [#allocation5], 1
    %463 = vsyncpa %s462, 1

// kernel: tpu_custom_call.1
$region0: #{tpu_custom_call.1}
  #allocation0 [shape = 'u32[]', space=smem, size = 0x4, offset = 0x4, fixed_abs, tag = 'smem constant byte address 0x4 - core index']
  #allocation1 [shape = 'u32[72,128]{1,0:T(1,128)}', space=vmem, size = 0x9000, scoped, tag = 'internal scratch']
  #allocation2 [shape = 'f32[72,256]{1,0:T(8,128)}', space=vmem, size = 0x12000, scoped, tag = 'scratch operand']
  %s0 = inlined_call_operand.hbm [shape: f32[2,4,256], index: 0, kind: input, shape index: {}]
  %s1 = inlined_call_operand.vmem [shape: f32[4,72], index: 1, kind: input, shape index: {}]
  %s2 = inlined_call_operand.vmem [shape: f32[4,1], index: 2, kind: input, shape index: {}]
  %s3 = inlined_call_operand.hbm [shape: f32[2,4,256], index: 3, kind: output, shape index: {}]
  %s4 = sld [smem:[#allocation0]]
  $region49: #{tpu_custom_call.1} parent=0
    _
  %s6 = ssub.s32 1, %s4
  %s7 = scalar_select 0, %s6, %s4
  $region1: #{tpu_custom_call.1} parent=0
    #allocation3 [shape = 'u8[8192]{0}', space=vmem, size = 0x2000, scoped, tag = 'input window, operand 0']
    #allocation4 [shape = 's32[2]{0}', space=sflag, size = 0x8, scoped, tag = 'scoped memory for tpu_custom_call.1']
    #allocation5 [shape = 's32[2]{0}', space=sflag, size = 0x8, scoped, tag = 'scoped memory for tpu_custom_call.1']
    #allocation6 [shape = 'u8[8192]{0}', space=vmem, size = 0x2000, scoped, tag = 'output window, operand 0']
    %8 = vsyncpa [#allocation4], 0
    %s9 = scalar_lea.sflag [#allocation4], 1
    %10 = vsyncpa %s9, 0
    %11 = vsyncpa [#allocation5], 0
    %s12 = scalar_lea.sflag [#allocation5], 1
    %13 = vsyncpa %s12, 0
    loop: start=0, step=1, limit=4
    $region2: #{tpu_custom_call.1} parent=1 // loop_pre_header
      _
    $region3: #{tpu_custom_call.1} parent=1 // loop_header
      %s15 = sphi 0, %s19
      %p16 = scmp.ge.s32.totalorder %s15, 4
      %s25 = sphi 0, %s27
      %s28 = sphi 0, %s25
      %s29 = sphi 0, %s28
      %s45 = sphi 0, %s29
      %s49 = sphi 0, %s49
      %s51 = sphi 0, %s49
      %s52 = sphi 0, %s51
      %s66 = sphi 0, %s52
      %s70 = sphi 0, %s70
      %s72 = sphi 0, %s70
      %s73 = sphi 0, %s72
      %s87 = sphi 0, %s73
      %s93 = sphi 0, %s95
      %s96 = sphi 0, %s93
      %s97 = sphi 0, %s96
      %s113 = sphi 0, %s97
    $region4: #{tpu_custom_call.1} parent=1 // loop_header_branch
      %18 = sbr.rel (%p16) target = $region8
    $region5: #{tpu_custom_call.1} parent=1 // loop_body
      %s20 = ssub.s32 %s15, 1
      %s21 = ssub.s32 %s15, 2
      %s22 = sadd.s32 %s15, 1
      %s23 = ssub.s32 %s15, %s22
      %p24 = scmp.eq.s32.totalorder %s23, 0
      %s26 = sadd.s32 %s25, 1
      %s27 = scalar_select %p24, %s25, %s26
      %p30 = pneg %p24
      %p31 = scmp.eq.s32.totalorder %s15, 1
      %p32 = por %p30, %p31
      %p33 = scmp.ne.s32.totalorder %s25, %s28
      %p34 = scmp.eq.s32.totalorder %s15, 0
      %p35 = por %p33, %p34
      %p36 = scmp.ne.s32.totalorder %s25, %s28
      %p37 = scmp.eq.s32.totalorder %s20, 1
      %p38 = por %p36, %p37
      %p39 = scmp.ne.s32.totalorder %s28, %s29
      %p40 = scmp.eq.s32.totalorder %s20, 0
      %p41 = por %p39, %p40
      %p42 = scmp.ne.s32.totalorder %s28, %s29
      %p43 = scmp.eq.s32.totalorder %s21, 1
      %p44 = por %p42, %p43
      %p46 = scmp.ne.s32.totalorder %s29, %s45
      %p47 = scmp.eq.s32.totalorder %s21, 0
      %p48 = por %p46, %p47
      %s50 = sadd.s32 %s49, 1
      %p53 = scmp.eq.s32.totalorder %s15, 1
      %p54 = scmp.ne.s32.totalorder %s49, %s51
      %p55 = scmp.eq.s32.totalorder %s15, 0
      %p56 = por %p54, %p55
      %p57 = scmp.ne.s32.totalorder %s49, %s51
      %p58 = scmp.eq.s32.totalorder %s20, 1
      %p59 = por %p57, %p58
      %p60 = scmp.ne.s32.totalorder %s51, %s52
      %p61 = scmp.eq.s32.totalorder %s20, 0
      %p62 = por %p60, %p61
      %p63 = scmp.ne.s32.totalorder %s51, %s52
      %p64 = scmp.eq.s32.totalorder %s21, 1
      %p65 = por %p63, %p64
      %p67 = scmp.ne.s32.totalorder %s52, %s66
      %p68 = scmp.eq.s32.totalorder %s21, 0
      %p69 = por %p67, %p68
      %s71 = sadd.s32 %s70, 1
      %p74 = scmp.eq.s32.totalorder %s15, 1
      %p75 = scmp.ne.s32.totalorder %s70, %s72
      %p76 = scmp.eq.s32.totalorder %s15, 0
      %p77 = por %p75, %p76
      %p78 = scmp.ne.s32.totalorder %s70, %s72
      %p79 = scmp.eq.s32.totalorder %s20, 1
      %p80 = por %p78, %p79
      %p81 = scmp.ne.s32.totalorder %s72, %s73
      %p82 = scmp.eq.s32.totalorder %s20, 0
      %p83 = por %p81, %p82
      %p84 = scmp.ne.s32.totalorder %s72, %s73
      %p85 = scmp.eq.s32.totalorder %s21, 1
      %p86 = por %p84, %p85
      %p88 = scmp.ne.s32.totalorder %s73, %s87
      %p89 = scmp.eq.s32.totalorder %s21, 0
      %p90 = por %p88, %p89
      %s91 = ssub.s32 %s15, %s22
      %p92 = scmp.eq.s32.totalorder %s91, 0
      %s94 = sadd.s32 %s93, 1
      %s95 = scalar_select %p92, %s93, %s94
      %p98 = pneg %p92
      %p99 = scmp.eq.s32.totalorder %s15, 1
      %p100 = por %p98, %p99
      %p101 = scmp.ne.s32.totalorder %s93, %s96
      %p102 = scmp.eq.s32.totalorder %s15, 0
      %p103 = por %p101, %p102
      %p104 = scmp.ne.s32.totalorder %s93, %s96
      %p105 = scmp.eq.s32.totalorder %s20, 1
      %p106 = por %p104, %p105
      %p107 = scmp.ne.s32.totalorder %s96, %s97
      %p108 = scmp.eq.s32.totalorder %s20, 0
      %p109 = por %p107, %p108
      %p110 = scmp.ne.s32.totalorder %s96, %s97
      %p111 = scmp.eq.s32.totalorder %s21, 1
      %p112 = por %p110, %p111
      %p114 = scmp.ne.s32.totalorder %s97, %s113
      %p115 = scmp.eq.s32.totalorder %s21, 0
      %p116 = por %p114, %p115
      %p117 = scmp.le.s32.totalorder 1, %s15
      %p118 = scmp.lt.s32.totalorder %s15, 3
      %p119 = pnand %p117, %p118
      %p120 = pneg %p119
      // Predicated region
      $region9: #{tpu_custom_call.1} parent=5 // pred_check
        _
      $region10: #{tpu_custom_call.1} parent=5 // pred_check_branch
        %122 = sbr.rel (%p119) target = $region12
      $region11: #{tpu_custom_call.1} parent=5 // pred_region
        %s123 = ssub.s32 %s15, 1
        // Predicated region
        $region13: #{tpu_custom_call.1} parent=11 // pred_check
          %p124 = pneg %p62
        $region14: #{tpu_custom_call.1} parent=11 // pred_check_branch
          %126 = sbr.rel (%p124) target = $region16
        $region15: #{tpu_custom_call.1} parent=11 // pred_region
          _
        $region16: #{tpu_custom_call.1} parent=11 // pred_fallthru
          _
        // Predicated region
        $region17: #{tpu_custom_call.1} parent=11 // pred_check
          %p127 = pneg %p83
        $region18: #{tpu_custom_call.1} parent=11 // pred_check_branch
          %129 = sbr.rel (%p127) target = $region20
        $region19: #{tpu_custom_call.1} parent=11 // pred_region
          _
        $region20: #{tpu_custom_call.1} parent=11 // pred_fallthru
          _
      $region12: #{tpu_custom_call.1} parent=5 // pred_fallthru
        _
      %p130 = scmp.lt.s32.totalorder %s15, 2
      // Predicated region
      $region21: #{tpu_custom_call.1} parent=5 // pred_check
        %p131 = pneg %p130
      $region22: #{tpu_custom_call.1} parent=5 // pred_check_branch
        %133 = sbr.rel (%p131) target = $region24
      $region23: #{tpu_custom_call.1} parent=5 // pred_region
        // Predicated region
        $region25: #{tpu_custom_call.1} parent=23 // pred_check
          %p134 = pneg %p35
        $region26: #{tpu_custom_call.1} parent=23 // pred_check_branch
          %136 = sbr.rel (%p134) target = $region28
        $region27: #{tpu_custom_call.1} parent=23 // pred_region
          %s137 = sand.u32 %s25, 1
          %s138 = scalar_lea.sflag [#allocation4], %s137
          %s139 = sand.u32 %s25, 1
          %s140 = smul.addr %s139, 8
          %s141 = scalar_lea.vmem [#allocation3], %s140
          %143 = vsyncadd %s138, 0
          %s144 = smul.addr %s15, 2
          %s145 = smul.addr %s144, 4
          %s146 = scalar_lea.hbm %s0, %s145
          %s148 = sshll.u32 %s146, 4
          %s149 = int_to_ptr.hbm [resolvable:$true] %s148
          %s150 = sshll.u32 %s141, 4
          %s151 = int_to_ptr.vmem [resolvable:$true] %s150
          %153 = dma.hbm_to_vmem [thread:$0]  %s149, 128, %s151, %s138
        $region28: #{tpu_custom_call.1} parent=23 // pred_fallthru
          _
      $region24: #{tpu_custom_call.1} parent=5 // pred_fallthru
        _
      %p154 = scmp.le.s32.totalorder 1, %s15
      %p155 = scmp.lt.s32.totalorder %s15, 3
      %p156 = pnand %p154, %p155
      %p157 = pneg %p156
      // Predicated region
      $region29: #{tpu_custom_call.1} parent=5 // pred_check
        _
      $region30: #{tpu_custom_call.1} parent=5 // pred_check_branch
        %159 = sbr.rel (%p156) target = $region32
      $region31: #{tpu_custom_call.1} parent=5 // pred_region
        %s160 = ssub.s32 %s15, 1
        %s161 = sand.u32 %s28, 1
        %s162 = scalar_lea.sflag [#allocation4], %s161
        %s163 = sand.u32 %s28, 1
        %s164 = smul.addr %s163, 8
        %s165 = scalar_lea.vmem [#allocation3], %s164
        // Predicated region
        $region33: #{tpu_custom_call.1} parent=31 // pred_check
          %p166 = pneg %p41
        $region34: #{tpu_custom_call.1} parent=31 // pred_check_branch
          %168 = sbr.rel (%p166) target = $region36
        $region35: #{tpu_custom_call.1} parent=31 // pred_region
          %170 = dma.done %s162, 128
        $region36: #{tpu_custom_call.1} parent=31 // pred_fallthru
          _
        %s171 = sand.u32 %s28, 1
        %s172 = scalar_lea.sflag [#allocation4], %s171
        %s173 = sand.u32 %s28, 1
        %s174 = smul.addr %s173, 8
        %s175 = scalar_lea.vmem [#allocation3], %s174
        %p176 = pneg %p41
        %p177 = pneg %p38
        %p178 = pneg %p62
        %p179 = pneg %p59
        %p180 = pneg %p83
        %p181 = pneg %p80
        %p182 = pneg %p109
        %p183 = pneg %p106
        %s184 = sand.u32 %s96, 1
        %s185 = scalar_lea.sflag [#allocation5], %s184
        %s186 = sand.u32 %s96, 1
        %s187 = smul.addr %s186, 8
        %s188 = scalar_lea.vmem [#allocation6], %s187
        %v189 = vld [vmem:[%s165] sm:$0xff]
        %191 = vst [vmem:[#allocation1] ss:$2 sm:$0xff] %v189
        %v192 = vld.sshfl [vmem:[#allocation1] sm:$0xff pattern:$0x75316420]
        %v193 = vld.sshfl [vmem:[#allocation1 + $0x8] sm:$0xff pattern:$0x75316420]
        %vm196 = vcmask 1043456
        %v197 = vsel %vm196, %v192, 0.0
        %v198 = vsel %vm196, %v193, 0.0
        %v199 = vlaneseq
        %v200 = vand.u32 %v199, 127
        %v201 = vadd.s32 %v200, 128
        %v202 = vand.u32 %v200, 15
        %v203 = vand.u32 %v201, 15
        %vm204 = vcmp.ge.s32.totalorder %v200, 16
        %vm205 = vcmp.ge.s32.totalorder %v201, 16
        %vm206 = vcmp.lt.s32.totalorder %v200, 240
        %vm207 = vcmp.lt.s32.totalorder %v201, 240
        %vm208 = vcmp.ge.s32.totalorder %v202, 1
        %vm209 = vcmp.ge.s32.totalorder %v203, 1
        %vm210 = vcmp.lt.s32.totalorder %v202, 15
        %vm211 = vcmp.lt.s32.totalorder %v203, 15
        %212 = vrot.lane.b32.xlu0 %v197, 17
        %v213 = vpop.permute.xlu0 %212
        %214 = vrot.lane.b32.xlu0 %v198, 17
        %v215 = vpop.permute.xlu0 %214
        %vm216 = vcmp.lt.s32.totalorder %v200, 17
        %v217 = vsel %vm216, %v213, %v215
        %v218 = vsel %vm216, %v215, %v213
        %vm219 = vmand %vm204, %vm208
        %vm220 = vmand %vm205, %vm209
        %v221 = vsel %vm219, 1, 0
        %v222 = vsel %vm220, 1, 0
        %vm223 = vcmp.eq.s32.totalorder %v221, 1
        %vm224 = vcmp.eq.s32.totalorder %v222, 1
        %v225 = vsel %vm223, %v218, 0.0
        %v226 = vsel %vm224, %v217, 0.0
        %227 = vst [vmem:[#allocation2] sm:$0xff] %v225
        %228 = vst [vmem:[#allocation2 + $0x8] sm:$0xff] %v226
        %229 = vrot.lane.b32.xlu0 %v197, 16
        %v230 = vpop.permute.xlu0 %229
        %231 = vrot.lane.b32.xlu0 %v198, 16
        %v232 = vpop.permute.xlu0 %231
        %vm233 = vcmp.lt.s32.totalorder %v200, 16
        %v234 = vsel %vm233, %v230, %v232
        %v235 = vsel %vm233, %v232, %v230
        %v236 = vsel %vm204, 1, 0
        %v237 = vsel %vm205, 1, 0
        %vm238 = vcmp.eq.s32.totalorder %v236, 1
        %vm239 = vcmp.eq.s32.totalorder %v237, 1
        %v240 = vsel %vm238, %v235, 0.0
        %v241 = vsel %vm239, %v234, 0.0
        %242 = vst [vmem:[#allocation2 + $0x10] sm:$0xff] %v240
        %243 = vst [vmem:[#allocation2 + $0x18] sm:$0xff] %v241
        %244 = vrot.lane.b32.xlu0 %v197, 15
        %v245 = vpop.permute.xlu0 %244
        %246 = vrot.lane.b32.xlu0 %v198, 15
        %v247 = vpop.permute.xlu0 %246
        %vm248 = vcmp.lt.s32.totalorder %v200, 15
        %v249 = vsel %vm248, %v245, %v247
        %v250 = vsel %vm248, %v247, %v245
        %vm251 = vmand %vm204, %vm210
        %vm252 = vmand %vm205, %vm211
        %v253 = vsel %vm251, 1, 0
        %v254 = vsel %vm252, 1, 0
        %vm255 = vcmp.eq.s32.totalorder %v253, 1
        %vm256 = vcmp.eq.s32.totalorder %v254, 1
        %v257 = vsel %vm255, %v250, 0.0
        %v258 = vsel %vm256, %v249, 0.0
        %259 = vst [vmem:[#allocation2 + $0x20] sm:$0xff] %v257
        %260 = vst [vmem:[#allocation2 + $0x28] sm:$0xff] %v258
        %261 = vrot.lane.b32.xlu0 %v197, 1
        %v262 = vpop.permute.xlu0 %261
        %263 = vrot.lane.b32.xlu0 %v198, 1
        %v264 = vpop.permute.xlu0 %263
        %vm265 = vcmp.lt.s32.totalorder %v200, 1
        %v266 = vsel %vm265, %v262, %v264
        %v267 = vsel %vm265, %v264, %v262
        %v268 = vsel %vm208, 1, 0
        %v269 = vsel %vm209, 1, 0
        %vm270 = vcmp.eq.s32.totalorder %v268, 1
        %vm271 = vcmp.eq.s32.totalorder %v269, 1
        %v272 = vsel %vm270, %v267, 0.0
        %v273 = vsel %vm271, %v266, 0.0
        %274 = vst [vmem:[#allocation2 + $0x30] sm:$0xff] %v272
        %275 = vst [vmem:[#allocation2 + $0x38] sm:$0xff] %v273
        %276 = vst [vmem:[#allocation2 + $0x40] sm:$0xff] %v197
        %277 = vst [vmem:[#allocation2 + $0x48] sm:$0xff] %v198
        %278 = vrot.lane.b32.xlu0 %v197, 127
        %v279 = vpop.permute.xlu0 %278
        %280 = vrot.lane.b32.xlu0 %v198, 127
        %v281 = vpop.permute.xlu0 %280
        %vm282 = vcmp.lt.s32.totalorder %v200, 127
        %v283 = vsel %vm282, %v279, %v281
        %v284 = vsel %vm282, %v281, %v279
        %v285 = vsel %vm210, 1, 0
        %v286 = vsel %vm211, 1, 0
        %vm287 = vcmp.eq.s32.totalorder %v285, 1
        %vm288 = vcmp.eq.s32.totalorder %v286, 1
        %v289 = vsel %vm287, %v283, 0.0
        %v290 = vsel %vm288, %v284, 0.0
        %291 = vst [vmem:[#allocation2 + $0x50] sm:$0xff] %v289
        %292 = vst [vmem:[#allocation2 + $0x58] sm:$0xff] %v290
        %293 = vrot.lane.b32.xlu0 %v197, 113
        %v294 = vpop.permute.xlu0 %293
        %295 = vrot.lane.b32.xlu0 %v198, 113
        %v296 = vpop.permute.xlu0 %295
        %vm297 = vcmp.lt.s32.totalorder %v200, 113
        %v298 = vsel %vm297, %v294, %v296
        %v299 = vsel %vm297, %v296, %v294
        %vm300 = vmand %vm206, %vm208
        %vm301 = vmand %vm207, %vm209
        %v302 = vsel %vm300, 1, 0
        %v303 = vsel %vm301, 1, 0
        %vm304 = vcmp.eq.s32.totalorder %v302, 1
        %vm305 = vcmp.eq.s32.totalorder %v303, 1
        %v306 = vsel %vm304, %v298, 0.0
        %v307 = vsel %vm305, %v299, 0.0
        %308 = vst [vmem:[#allocation2 + $0x60] sm:$0xff] %v306
        %309 = vst [vmem:[#allocation2 + $0x68] sm:$0xff] %v307
        %310 = vrot.lane.b32.xlu0 %v197, 112
        %v311 = vpop.permute.xlu0 %310
        %312 = vrot.lane.b32.xlu0 %v198, 112
        %v313 = vpop.permute.xlu0 %312
        %vm314 = vcmp.lt.s32.totalorder %v200, 112
        %v315 = vsel %vm314, %v311, %v313
        %v316 = vsel %vm314, %v313, %v311
        %v317 = vsel %vm206, 1, 0
        %v318 = vsel %vm207, 1, 0
        %vm319 = vcmp.eq.s32.totalorder %v317, 1
        %vm320 = vcmp.eq.s32.totalorder %v318, 1
        %v321 = vsel %vm319, %v315, 0.0
        %v322 = vsel %vm320, %v316, 0.0
        %323 = vst [vmem:[#allocation2 + $0x70] sm:$0xff] %v321
        %324 = vst [vmem:[#allocation2 + $0x78] sm:$0xff] %v322
        %325 = vrot.lane.b32.xlu0 %v197, 111
        %v326 = vpop.permute.xlu0 %325
        %327 = vrot.lane.b32.xlu0 %v198, 111
        %v328 = vpop.permute.xlu0 %327
        %vm329 = vcmp.lt.s32.totalorder %v200, 111
        %v330 = vsel %vm329, %v326, %v328
        %v331 = vsel %vm329, %v328, %v326
        %vm332 = vmand %vm206, %vm210
        %vm333 = vmand %vm207, %vm211
        %v334 = vsel %vm332, 1, 0
        %v335 = vsel %vm333, 1, 0
        %vm336 = vcmp.eq.s32.totalorder %v334, 1
        %vm337 = vcmp.eq.s32.totalorder %v335, 1
        %v338 = vsel %vm336, %v330, 0.0
        %v339 = vsel %vm337, %v331, 0.0
        %340 = vst [vmem:[#allocation2 + $0x80] sm:$0xff] %v338
        %341 = vst [vmem:[#allocation2 + $0x88] sm:$0xff] %v339
        %v342 = vld [vmem:[%s1] sm:$0xf]
        %v343 = vld [vmem:[#allocation2] sm:$0xff]
        %v344 = vld [vmem:[#allocation2 + $0x8] sm:$0xff]
        %v345 = vld [vmem:[#allocation2 + $0x10] sm:$0xff]
        %v346 = vld [vmem:[#allocation2 + $0x18] sm:$0xff]
        %v347 = vld [vmem:[#allocation2 + $0x20] sm:$0xff]
        %v348 = vld [vmem:[#allocation2 + $0x28] sm:$0xff]
        %v349 = vld [vmem:[#allocation2 + $0x30] sm:$0xff]
        %v350 = vld [vmem:[#allocation2 + $0x38] sm:$0xff]
        %v351 = vld [vmem:[#allocation2 + $0x40] sm:$0xff]
        %v352 = vld [vmem:[#allocation2 + $0x48] sm:$0xff]
        %v353 = vld [vmem:[#allocation2 + $0x50] sm:$0xff]
        %v354 = vld [vmem:[#allocation2 + $0x58] sm:$0xff]
        %v355 = vld [vmem:[#allocation2 + $0x60] sm:$0xff]
        %v356 = vld [vmem:[#allocation2 + $0x68] sm:$0xff]
        %v357 = vld [vmem:[#allocation2 + $0x70] sm:$0xff]
        %v358 = vld [vmem:[#allocation2 + $0x78] sm:$0xff]
        %v359 = vld [vmem:[#allocation2 + $0x80] sm:$0xff]
        %v360 = vld [vmem:[#allocation2 + $0x88] sm:$0xff]
        %vm361 = vcmask 588800
        %v363 = vsel %vm361, %v342, 0
        %365 = vmatpush.msra.mxu0 0.0
        %366 = vmatpush.msra.mxu0 0.0
        %367 = vmatpush.msra.mxu0 0.0
        %368 = vmatpush.msra.mxu0 0.0
        %369 = vmatpush.msra.mxu0 0.0
        %370 = vmatpush.msra.mxu0 0.0
        %371 = vmatpush.msra.mxu0 0.0
        %372 = vmatpush.msra.mxu0 %v359
        %373 = vmatpush.msra.mxu0 %v357
        %374 = vmatpush.msra.mxu0 %v355
        %375 = vmatpush.msra.mxu0 %v353
        %376 = vmatpush.msra.mxu0 %v351
        %377 = vmatpush.msra.mxu0 %v349
        %378 = vmatpush.msra.mxu0 %v347
        %379 = vmatpush.msra.mxu0 %v345
        %380 = vmatpush.msra.mxu0 %v343
        %381 = vmatmul.f32.gmra.mxu0 %v363
        %v382 = vpop.f32.mrf.mxu0
        %v383 = vadd.f32 0.0, %v382
        %384 = vdwg.mxu0
        %385 = vmatpush.msra.mxu0 0.0
        %386 = vmatpush.msra.mxu0 0.0
        %387 = vmatpush.msra.mxu0 0.0
        %388 = vmatpush.msra.mxu0 0.0
        %389 = vmatpush.msra.mxu0 0.0
        %390 = vmatpush.msra.mxu0 0.0
        %391 = vmatpush.msra.mxu0 0.0
        %392 = vmatpush.msra.mxu0 %v360
        %393 = vmatpush.msra.mxu0 %v358
        %394 = vmatpush.msra.mxu0 %v356
        %395 = vmatpush.msra.mxu0 %v354
        %396 = vmatpush.msra.mxu0 %v352
        %397 = vmatpush.msra.mxu0 %v350
        %398 = vmatpush.msra.mxu0 %v348
        %399 = vmatpush.msra.mxu0 %v346
        %400 = vmatpush.msra.mxu0 %v344
        %401 = vmatmul.f32.gmra.mxu0 %v363
        %v402 = vpop.f32.mrf.mxu0
        %v403 = vadd.f32 0.0, %v402
        %404 = vdwg.mxu0
        %v407 = vrot.slane %v403, 4
        %v408 = vsel %vm196, %v383, %v407
        %v410 = vadd.f32 %v189, %v408
        %v411 = vld [vmem:[%s2] sm:$0xf]
        %413 = vset.pattern.permute.xlu0 0
        %414 = vperm.xlu0 %413, %v411
        %v415 = vpop.permute.xlu0 %414
        %v417 = vunpack.c.l.s4 839922192
        %v418 = vunpack.c.0.s8 %v417
        %v419 = vperm.slane %v415, %v418
        %v421 = vadd.f32 %v410, %v419
        %422 = vst [vmem:[%s188] sm:$0xff] %v421
        %s423 = sand.u32 %s96, 1
        %s424 = scalar_lea.sflag [#allocation5], %s423
        %s425 = sand.u32 %s96, 1
        %s426 = smul.addr %s425, 8
        %s427 = scalar_lea.vmem [#allocation6], %s426
        // Predicated region
        $region37: #{tpu_custom_call.1} parent=31 // pred_check
          %p428 = pneg %p106
        $region38: #{tpu_custom_call.1} parent=31 // pred_check_branch
          %430 = sbr.rel (%p428) target = $region40
        $region39: #{tpu_custom_call.1} parent=31 // pred_region
          %432 = vsyncadd %s424, 0
          %s433 = smul.addr %s20, 2
          %s434 = smul.addr %s433, 4
          %s435 = scalar_lea.hbm %s3, %s434
          %s437 = sshll.u32 %s427, 4
          %s438 = int_to_ptr.vmem [resolvable:$true] %s437
          %s439 = sshll.u32 %s435, 4
          %s440 = int_to_ptr.hbm [resolvable:$true] %s439
          %442 = dma.vmem_to_hbm [thread:$0]  %s438, 128, %s440, %s424
        $region40: #{tpu_custom_call.1} parent=31 // pred_fallthru
          _
      $region32: #{tpu_custom_call.1} parent=5 // pred_fallthru
        _
      %p443 = scmp.le.s32.totalorder 2, %s15
      // Predicated region
      $region41: #{tpu_custom_call.1} parent=5 // pred_check
        %p444 = pneg %p443
      $region42: #{tpu_custom_call.1} parent=5 // pred_check_branch
        %446 = sbr.rel (%p444) target = $region44
      $region43: #{tpu_custom_call.1} parent=5 // pred_region
        %s447 = ssub.s32 %s15, 2
        // Predicated region
        $region45: #{tpu_custom_call.1} parent=43 // pred_check
          %p448 = pneg %p112
        $region46: #{tpu_custom_call.1} parent=43 // pred_check_branch
          %450 = sbr.rel (%p448) target = $region48
        $region47: #{tpu_custom_call.1} parent=43 // pred_region
          %s451 = sand.u32 %s97, 1
          %s452 = scalar_lea.sflag [#allocation5], %s451
          %s453 = sand.u32 %s97, 1
          %s454 = smul.addr %s453, 8
          %s455 = scalar_lea.vmem [#allocation6], %s454
          %457 = dma.done %s452, 128
        $region48: #{tpu_custom_call.1} parent=43 // pred_fallthru
          _
      $region44: #{tpu_custom_call.1} parent=5 // pred_fallthru
        _
    $region6: #{tpu_custom_call.1} parent=1 // loop_footer
      %s19 = sadd.s32 1, %s15
    $region7: #{tpu_custom_call.1} parent=1 // loop_footer_branch
      %14 = sbr.rel target = $region3
    $region8: #{tpu_custom_call.1} parent=1 // loop_exit
      _
    %458 = vsyncpa [#allocation4], 1
    %s459 = scalar_lea.sflag [#allocation4], 1
    %460 = vsyncpa %s459, 1
    %461 = vsyncpa [#allocation5], 1
    %s462 = scalar_lea.sflag [#allocation5], 1
    %463 = vsyncpa %s462, 1

</llo_original>
